<compile_context>
chip_gen: v7x
topology: tpu7x:2x2x1
jax: 0.10.0
libtpu: 0.0.40
codegen_flags: <defaults>
</compile_context>

<pallas_src>
import jax
import jax.numpy as jnp
from jax.experimental import pallas as pl
from jax.experimental.pallas import tpu as pltpu


def _round_up(n, m):
    return ((n + m - 1) // m) * m


def _cat_mlp_kernel(block_cat_ref, x_ref, w1_ref, b1_ref, w2_ref, b2_ref, out_ref):
    """One grid step = one same-category run of G*T_p activation rows.

    block_cat_ref: (num_blocks,) int32 SMEM (scalar prefetch; consumed only by
                   the index_maps -- the kernel body never reads it).
    x_ref:   (M, D_in_p)        VMEM  this run's activations (one category)
    w1_ref:  (1, D_in_p, H_p)   VMEM  this run's category W1
    b1_ref:  (1, 1, H_p)        VMEM  f32 bias
    w2_ref:  (1, H_p, D_out_p)  VMEM
    b2_ref:  (1, 1, D_out_p)    VMEM  f32 bias
    out_ref: (M, D_out_p)       VMEM
    """
    del block_cat_ref
    x = x_ref[...]                                           # (M, D_in_p)
    h = jnp.dot(x, w1_ref[0], preferred_element_type=jnp.float32)
    h = jnp.maximum(h + b1_ref[0], 0.0)                      # f32 bias + ReLU
    # TODO(synk): keep h in f32 for the second dot (mixed-precision MXU) if the
    # bf16 round-trip between layers is outside the accuracy budget.
    y = jnp.dot(h.astype(x.dtype), w2_ref[0],
                preferred_element_type=jnp.float32) + b2_ref[0]
    out_ref[...] = y.astype(out_ref.dtype)


def category_specific_mlp(x, cat_ids, W1, b1, W2, b2, *,
                          group_size=32, compute_dtype=jnp.bfloat16,
                          out_dtype=None):
    """x: (B, T, D_in); cat_ids: (B,) int; W1: (C, D_in, H); b1: (C, H);
    W2: (C, H, D_out); b2: (C, D_out). Returns (B, T, D_out) in out_dtype
    (defaults to x.dtype; pass bf16 on v5e to halve store traffic)."""
    B, T, D_in = x.shape
    C, _, H = W1.shape
    D_out = W2.shape[-1]
    out_dtype = jnp.dtype(out_dtype if out_dtype is not None else x.dtype)
    cdt = jnp.dtype(compute_dtype)

    # Lane/sublane-dense padding (all padding is zeros => numerically inert).
    sub = 16 if cdt == jnp.dtype(jnp.bfloat16) else 8
    D_in_p = _round_up(D_in, 128)
    H_p = _round_up(H, 128)
    D_out_p = _round_up(D_out, 128)
    T_p = _round_up(T, sub)

    G = max(1, min(group_size, B))        # batch elements per grid step
    M = G * T_p                           # MXU M dimension per matmul

    # ---------------- category-run grouping (all shapes static) -------------
    cat_ids = cat_ids.astype(jnp.int32)
    order = jnp.argsort(cat_ids)          # sort batch by category
    inv = jnp.argsort(order)              # original index -> sorted position

    counts = jnp.bincount(cat_ids, length=C).astype(jnp.int32)        # (C,)
    starts = jnp.concatenate(
        [jnp.zeros((1,), jnp.int32), jnp.cumsum(counts)[:-1]])        # (C,)
    blocks_per_cat = (counts + G - 1) // G                            # (C,)
    bcum = jnp.cumsum(blocks_per_cat)
    bstarts = jnp.concatenate(
        [jnp.zeros((1,), jnp.int32), bcum[:-1].astype(jnp.int32)])    # (C,)

    num_blocks = int(pl.cdiv(B, G)) + C   # static upper bound on used blocks

    block_ids = jnp.arange(num_blocks, dtype=jnp.int32)
    raw_cat = jnp.searchsorted(bcum, block_ids, side="right")         # [0, C]
    block_cat = jnp.minimum(raw_cat, C - 1).astype(jnp.int32)         # clamp
    block_in_cat = block_ids - bstarts[block_cat]

    j = jnp.arange(G, dtype=jnp.int32)
    sorted_row = (starts[block_cat][:, None]
                  + block_in_cat[:, None] * G + j[None, :])           # (nb, G)
    run_end = (starts[block_cat] + counts[block_cat])[:, None]
    valid = (sorted_row < run_end) & (raw_cat[:, None] < C)
    sorted_row = jnp.where(valid, sorted_row, B)   # B -> zero pad row

    # Gather activations into category-run order (+ one zero pad row).
    x_sorted = jnp.concatenate(
        [jnp.take(x, order, axis=0), jnp.zeros((1, T, D_in), x.dtype)], axis=0)
    x_grouped = jnp.take(x_sorted, sorted_row.reshape(-1), axis=0)    # (nb*G,T,Din)
    x_grouped = jnp.pad(x_grouped.astype(cdt),
                        ((0, 0), (0, T_p - T), (0, D_in_p - D_in)))
    x_grouped = x_grouped.reshape(num_blocks * M, D_in_p)             # 2-D slab

    # Padded / cast parameters. Biases stay f32 (added to the f32 accumulator)
    # and get a singleton middle axis so their block sublane dim == full dim.
    W1_p = jnp.pad(W1.astype(cdt), ((0, 0), (0, D_in_p - D_in), (0, H_p - H)))
    W2_p = jnp.pad(W2.astype(cdt), ((0, 0), (0, H_p - H), (0, D_out_p - D_out)))
    b1_p = jnp.pad(b1.astype(jnp.float32), ((0, 0), (0, H_p - H)))[:, None, :]
    b2_p = jnp.pad(b2.astype(jnp.float32), ((0, 0), (0, D_out_p - D_out)))[:, None, :]

    grid_spec = pltpu.PrefetchScalarGridSpec(
        num_scalar_prefetch=1,
        grid=(num_blocks,),
        in_specs=[
            # Activations: one same-category run per step.
            pl.BlockSpec((M, D_in_p), lambda s, bc: (s, 0)),
            # Per-category weights/biases picked by the prefetched map; since
            # the batch is category-sorted, consecutive steps of one category
            # return the same block index and the DMA is skipped (weights are
            # fetched once per category run, double-buffered across runs).
            pl.BlockSpec((1, D_in_p, H_p), lambda s, bc: (bc[s], 0, 0)),
            pl.BlockSpec((1, 1, H_p), lambda s, bc: (bc[s], 0, 0)),
            pl.BlockSpec((1, H_p, D_out_p), lambda s, bc: (bc[s], 0, 0)),
            pl.BlockSpec((1, 1, D_out_p), lambda s, bc: (bc[s], 0, 0)),
        ],
        out_specs=pl.BlockSpec((M, D_out_p), lambda s, bc: (s, 0)),
    )

    # VMEM budget (double-buffered blocks) + generation-aware limit.
    per_cat_w_bytes = ((D_in_p * H_p + H_p * D_out_p) * cdt.itemsize
                       + (H_p + D_out_p) * 4)
    x_blk = M * D_in_p * cdt.itemsize
    o_blk = M * D_out_p * out_dtype.itemsize
    vmem_est = 2 * (per_cat_w_bytes + x_blk + o_blk) + (1 << 20)

    compiler_kwargs = dict(dimension_semantics=("parallel",))
    if vmem_est > (16 << 20):             # above v5e's default scoped limit
        try:
            cap = int(pltpu.get_tpu_info().vmem_capacity_bytes)
        except Exception:
            cap = 64 << 20                # conservative: v7x per-TC physical
        compiler_kwargs["vmem_limit_bytes"] = int(min(vmem_est, (cap * 3) // 4))

    cost = pl.CostEstimate(
        flops=2 * num_blocks * M * (D_in_p * H_p + H_p * D_out_p),
        transcendentals=0,
        bytes_accessed=int(num_blocks * (x_blk + o_blk)
                           + min(C, num_blocks) * per_cat_w_bytes),
    )

    out_grouped = pl.pallas_call(
        _cat_mlp_kernel,
        out_shape=jax.ShapeDtypeStruct((num_blocks * M, D_out_p), out_dtype),
        grid_spec=grid_spec,
        compiler_params=pltpu.CompilerParams(**compiler_kwargs),
        cost_estimate=cost,
    )(block_cat, x_grouped, W1_p, b1_p, W2_p, b2_p)

    # Scatter back to original batch order and strip padding.
    out_grouped = out_grouped.reshape(num_blocks * G, T_p, D_out_p)
    grouped_pos = bstarts[cat_ids] * G + (inv - starts[cat_ids])
    return jnp.take(out_grouped, grouped_pos, axis=0)[:, :T, :D_out]


def category_specific_mlp_ref(x, cat_ids, W1, b1, W2, b2):
    """Pure-JAX reference mirroring the PyTorch forward (f32)."""
    sw1 = W1[cat_ids]          # (B, D_in, H)
    sb1 = b1[cat_ids]          # (B, H)
    h = jnp.einsum("btd,bdh->bth", x, sw1, precision="highest") + sb1[:, None, :]
    h = jnp.maximum(h, 0.0)
    sw2 = W2[cat_ids]          # (B, H, D_out)
    sb2 = b2[cat_ids]          # (B, D_out)
    return jnp.einsum("bth,bho->bto", h, sw2, precision="highest") + sb2[:, None, :]


if __name__ == "__main__":
    # Small shapes consistent with the module's forward.
    num_categories = 3
    B, T = 4, 8
    input_dim, hidden_dim, output_dim = 32, 64, 16

    key = jax.random.PRNGKey(0)
    k_x, k_w1, k_b1, k_w2, k_b2, k_cat = jax.random.split(key, 6)

    # Weights ~ 0.02*randn like __init__; biases made nonzero here so the
    # bias-add path is actually exercised (module init would be zeros).
    W1 = 0.02 * jax.random.normal(k_w1, (num_categories, input_dim, hidden_dim), jnp.float32)
    b1 = 0.02 * jax.random.normal(k_b1, (num_categories, hidden_dim), jnp.float32)
    W2 = 0.02 * jax.random.normal(k_w2, (num_categories, hidden_dim, output_dim), jnp.float32)
    b2 = 0.02 * jax.random.normal(k_b2, (num_categories, output_dim), jnp.float32)

    x = jax.random.normal(k_x, (B, T, input_dim), jnp.float32)
    cat_ids = jax.random.randint(k_cat, (B,), 0, num_categories, jnp.int32)

    ref = category_specific_mlp_ref(x, cat_ids, W1, b1, W2, b2)

    # f32 path: tight check against the reference.
    out_f32 = jax.block_until_ready(
        category_specific_mlp(x, cat_ids, W1, b1, W2, b2, compute_dtype=jnp.float32))
    assert out_f32.shape == (B, T, output_dim)
    assert jnp.allclose(out_f32, ref, atol=1e-4, rtol=1e-4), "f32 mismatch vs reference"

    # bf16 MXU fast path (v6e/v7x): loose check (bf16 operands, f32 accumulation).
    out_bf16 = jax.block_until_ready(
        category_specific_mlp(x, cat_ids, W1, b1, W2, b2, compute_dtype=jnp.bfloat16))
    assert out_bf16.shape == (B, T, output_dim)
    assert jnp.allclose(out_bf16.astype(jnp.float32), ref, atol=2e-2, rtol=2e-1), \
        "bf16 mismatch vs reference"

    print("KERNEL_OK")
</pallas_src>

<mosaic_0001>
module attributes {stable_mosaic.version = 11 : i64} {
  func.func @_cat_mlp_kernel(%arg0: i32, %arg1: memref<4xi32, #tpu.memory_space<smem>>, %arg2: memref<32x128xf32, #tpu.memory_space<vmem>>, %arg3: memref<1x128x128xf32, #tpu.memory_space<vmem>>, %arg4: memref<1x1x128xf32, #tpu.memory_space<vmem>>, %arg5: memref<1x128x128xf32, #tpu.memory_space<vmem>>, %arg6: memref<1x1x128xf32, #tpu.memory_space<vmem>>, %arg7: memref<32x128xf32, #tpu.memory_space<vmem>>) attributes {dimension_semantics = [#tpu.dimension_semantics<parallel>], iteration_bounds = array<i64: 4>, scalar_prefetch = 1 : i64, scratch_operands = 0 : i64, tpu.core_type = #tpu.core_type<tc>, window_params = [{transform_indices = @transform_0, window_bounds = array<i64: 32, 128>}, {transform_indices = @transform_1, window_bounds = array<i64: 1, 128, 128>}, {transform_indices = @transform_2, window_bounds = array<i64: 1, 1, 128>}, {transform_indices = @transform_3, window_bounds = array<i64: 1, 128, 128>}, {transform_indices = @transform_4, window_bounds = array<i64: 1, 1, 128>}, {transform_indices = @transform_5, window_bounds = array<i64: 32, 128>}]} {
    %c0 = arith.constant 0 : index
    %c0_0 = arith.constant 0 : index
    %0 = vector.load %arg2[%c0, %c0_0] : memref<32x128xf32, #tpu.memory_space<vmem>>, vector<32x128xf32>
    %c0_1 = arith.constant 0 : index
    %c0_2 = arith.constant 0 : index
    %c0_3 = arith.constant 0 : index
    %1 = vector.load %arg3[%c0_1, %c0_2, %c0_3] : memref<1x128x128xf32, #tpu.memory_space<vmem>>, vector<1x128x128xf32>
    %2 = vector.shape_cast %1 : vector<1x128x128xf32> to vector<128x128xf32>
    %cst = arith.constant dense<0.000000e+00> : vector<32x128xf32>
    %3 = tpu.matmul %0, %2, %cst {dimension_numbers = #tpu.dot_dimension_numbers<[1], [0], [0], [1], [0, 0, 1, 1], [], []>} : vector<32x128xf32>, vector<128x128xf32>, vector<32x128xf32> -> vector<32x128xf32>
    %c0_4 = arith.constant 0 : index
    %c0_5 = arith.constant 0 : index
    %c0_6 = arith.constant 0 : index
    %4 = vector.load %arg4[%c0_4, %c0_5, %c0_6] : memref<1x1x128xf32, #tpu.memory_space<vmem>>, vector<1x1x128xf32>
    %5 = vector.shape_cast %4 : vector<1x1x128xf32> to vector<1x128xf32>
    %6 = vector.broadcast %5 : vector<1x128xf32> to vector<32x128xf32>
    %7 = arith.addf %3, %6 : vector<32x128xf32>
    %cst_7 = arith.constant 0.000000e+00 : f32
    %8 = vector.broadcast %cst_7 : f32 to vector<32x128xf32>
    %9 = arith.maximumf %7, %8 : vector<32x128xf32>
    %c0_8 = arith.constant 0 : index
    %c0_9 = arith.constant 0 : index
    %c0_10 = arith.constant 0 : index
    %10 = vector.load %arg5[%c0_8, %c0_9, %c0_10] : memref<1x128x128xf32, #tpu.memory_space<vmem>>, vector<1x128x128xf32>
    %11 = vector.shape_cast %10 : vector<1x128x128xf32> to vector<128x128xf32>
    %cst_11 = arith.constant dense<0.000000e+00> : vector<32x128xf32>
    %12 = tpu.matmul %9, %11, %cst_11 {dimension_numbers = #tpu.dot_dimension_numbers<[1], [0], [0], [1], [0, 0, 1, 1], [], []>} : vector<32x128xf32>, vector<128x128xf32>, vector<32x128xf32> -> vector<32x128xf32>
    %c0_12 = arith.constant 0 : index
    %c0_13 = arith.constant 0 : index
    %c0_14 = arith.constant 0 : index
    %13 = vector.load %arg6[%c0_12, %c0_13, %c0_14] : memref<1x1x128xf32, #tpu.memory_space<vmem>>, vector<1x1x128xf32>
    %14 = vector.shape_cast %13 : vector<1x1x128xf32> to vector<1x128xf32>
    %15 = vector.broadcast %14 : vector<1x128xf32> to vector<32x128xf32>
    %16 = arith.addf %12, %15 : vector<32x128xf32>
    %c0_15 = arith.constant 0 : index
    %c0_16 = arith.constant 0 : index
    %17 = vector.load %arg7[%c0_15, %c0_16] : memref<32x128xf32, #tpu.memory_space<vmem>>, vector<32x128xf32>
    tpu.vector_store %arg7[%c0_15, %c0_16], %16 {strides = array<i32>} : memref<32x128xf32, #tpu.memory_space<vmem>>, vector<32x128xf32>,
    return
  }
  func.func @transform_0(%arg0: i32, %arg1: memref<4xi32, #tpu.memory_space<smem>>) -> (i32, i32) {
    %c0_i32 = arith.constant 0 : i32
    %c0_i32_0 = arith.constant 0 : i32
    return %arg0, %c0_i32 : i32, i32
  }
  func.func @transform_1(%arg0: i32, %arg1: memref<4xi32, #tpu.memory_space<smem>>) -> (i32, i32, i32) {
    %0 = arith.index_cast %arg0 : i32 to index
    %1 = memref.load %arg1[%0] : memref<4xi32, #tpu.memory_space<smem>>
    %c0_i32 = arith.constant 0 : i32
    %c0_i32_0 = arith.constant 0 : i32
    %c0_i32_1 = arith.constant 0 : i32
    return %1, %c0_i32, %c0_i32_0 : i32, i32, i32
  }
  func.func @transform_2(%arg0: i32, %arg1: memref<4xi32, #tpu.memory_space<smem>>) -> (i32, i32, i32) {
    %0 = arith.index_cast %arg0 : i32 to index
    %1 = memref.load %arg1[%0] : memref<4xi32, #tpu.memory_space<smem>>
    %c0_i32 = arith.constant 0 : i32
    %c0_i32_0 = arith.constant 0 : i32
    %c0_i32_1 = arith.constant 0 : i32
    return %1, %c0_i32, %c0_i32_0 : i32, i32, i32
  }
  func.func @transform_3(%arg0: i32, %arg1: memref<4xi32, #tpu.memory_space<smem>>) -> (i32, i32, i32) {
    %0 = arith.index_cast %arg0 : i32 to index
    %1 = memref.load %arg1[%0] : memref<4xi32, #tpu.memory_space<smem>>
    %c0_i32 = arith.constant 0 : i32
    %c0_i32_0 = arith.constant 0 : i32
    %c0_i32_1 = arith.constant 0 : i32
    return %1, %c0_i32, %c0_i32_0 : i32, i32, i32
  }
  func.func @transform_4(%arg0: i32, %arg1: memref<4xi32, #tpu.memory_space<smem>>) -> (i32, i32, i32) {
    %0 = arith.index_cast %arg0 : i32 to index
    %1 = memref.load %arg1[%0] : memref<4xi32, #tpu.memory_space<smem>>
    %c0_i32 = arith.constant 0 : i32
    %c0_i32_0 = arith.constant 0 : i32
    %c0_i32_1 = arith.constant 0 : i32
    return %1, %c0_i32, %c0_i32_0 : i32, i32, i32
  }
  func.func @transform_5(%arg0: i32, %arg1: memref<4xi32, #tpu.memory_space<smem>>) -> (i32, i32) {
    %c0_i32 = arith.constant 0 : i32
    %c0_i32_0 = arith.constant 0 : i32
    return %arg0, %c0_i32 : i32, i32
  }
}

</mosaic_0001>

<llo_original>
// kernel: tpu_custom_call.1
$region0: #{tpu_custom_call.1}
  #allocation0 [shape = 'u32[]', space=smem, size = 0x4, offset = 0x4, fixed_abs, tag = 'smem constant byte address 0x4 - core index']
  #allocation1 [shape = 'u32[144,128]{1,0:T(1,128)}', space=vmem, size = 0x12000, scoped, tag = 'internal scratch']
  #allocation2 [shape = 's32[1]{0}', space=sflag, size = 0x4, scoped, tag = 'scoped memory for tpu_custom_call.1']
  #allocation3 [shape = 'u8[512]{0}', space=smem, size = 0x200, scoped, tag = 'prefetched SMEM operand 0']
  %s0 = inlined_call_operand.hbm [shape: s32[4], index: 0, kind: input, shape index: {}]
  %s1 = inlined_call_operand.hbm [shape: f32[128,128], index: 1, kind: input, shape index: {}]
  %s2 = inlined_call_operand.hbm [shape: f32[3,128,128], index: 2, kind: input, shape index: {}]
  %s3 = inlined_call_operand.vmem [shape: f32[3,1,128], index: 3, kind: input, shape index: {}]
  %s4 = inlined_call_operand.hbm [shape: f32[3,128,128], index: 4, kind: input, shape index: {}]
  %s5 = inlined_call_operand.vmem [shape: f32[3,1,128], index: 5, kind: input, shape index: {}]
  %s6 = inlined_call_operand.hbm [shape: f32[128,128], index: 6, kind: output, shape index: {}]
  %s7 = sld [smem:[#allocation0]]
  $region65: #{tpu_custom_call.1} parent=0
    _
  %s9 = ssub.s32 1, %s7
  %s10 = scalar_select 0, %s9, %s7
  %12 = dma.hbm_to_smem %s0, 16, [#allocation3], [#allocation2]
  %13 = dma.done [#allocation2], 16
  %14 = sfence
  $region1: #{tpu_custom_call.1} parent=0
    #allocation4 [shape = 'u8[32768]{0}', space=vmem, size = 0x8000, scoped, tag = 'input window, operand 1']
    #allocation5 [shape = 's32[2]{0}', space=sflag, size = 0x8, scoped, tag = 'scoped memory for tpu_custom_call.1']
    #allocation6 [shape = 's32[2]{0}', space=sflag, size = 0x8, scoped, tag = 'scoped memory for tpu_custom_call.1']
    #allocation7 [shape = 'u8[131072]{0}', space=vmem, size = 0x20000, scoped, tag = 'input window, operand 2']
    #allocation8 [shape = 's32[2]{0}', space=sflag, size = 0x8, scoped, tag = 'scoped memory for tpu_custom_call.1']
    #allocation9 [shape = 'u8[131072]{0}', space=vmem, size = 0x20000, scoped, tag = 'input window, operand 4']
    #allocation10 [shape = 'u8[32768]{0}', space=vmem, size = 0x8000, scoped, tag = 'output window, operand 0']
    %15 = vsyncpa [#allocation5], 0
    %s16 = scalar_lea.sflag [#allocation5], 1
    %17 = vsyncpa %s16, 0
    %18 = vsyncpa [#allocation8], 0
    %s19 = scalar_lea.sflag [#allocation8], 1
    %20 = vsyncpa %s19, 0
    %21 = vsyncpa [#allocation6], 0
    %s22 = scalar_lea.sflag [#allocation6], 1
    %23 = vsyncpa %s22, 0
    loop: start=0, step=1, limit=6
    $region2: #{tpu_custom_call.1} parent=1 // loop_pre_header
      _
    $region3: #{tpu_custom_call.1} parent=1 // loop_header
      %s25 = sphi 0, %s29
      %p26 = scmp.ge.s32.totalorder %s25, 6
      %s35 = sphi 0, %s37
      %s38 = sphi 0, %s35
      %s39 = sphi 0, %s38
      %s55 = sphi 0, %s39
      %s63 = sphi 0, %s65
      %s66 = sphi 0, %s63
      %s67 = sphi 0, %s66
      %s83 = sphi 0, %s67
      %s91 = sphi 0, %s93
      %s94 = sphi 0, %s91
      %s95 = sphi 0, %s94
      %s111 = sphi 0, %s95
      %s119 = sphi 0, %s121
      %s122 = sphi 0, %s119
      %s123 = sphi 0, %s122
      %s139 = sphi 0, %s123
      %s147 = sphi 0, %s149
      %s150 = sphi 0, %s147
      %s151 = sphi 0, %s150
      %s167 = sphi 0, %s151
      %s173 = sphi 0, %s175
      %s176 = sphi 0, %s173
      %s177 = sphi 0, %s176
      %s193 = sphi 0, %s177
    $region4: #{tpu_custom_call.1} parent=1 // loop_header_branch
      %28 = sbr.rel (%p26) target = $region8
    $region5: #{tpu_custom_call.1} parent=1 // loop_body
      %s30 = ssub.s32 %s25, 1
      %s31 = ssub.s32 %s25, 2
      %s32 = sadd.s32 %s25, 1
      %s33 = ssub.s32 %s25, %s32
      %p34 = scmp.eq.s32.totalorder %s33, 0
      %s36 = sadd.s32 %s35, 1
      %s37 = scalar_select %p34, %s35, %s36
      %p40 = pneg %p34
      %p41 = scmp.eq.s32.totalorder %s25, 3
      %p42 = por %p40, %p41
      %p43 = scmp.ne.s32.totalorder %s35, %s38
      %p44 = scmp.eq.s32.totalorder %s25, 0
      %p45 = por %p43, %p44
      %p46 = scmp.ne.s32.totalorder %s35, %s38
      %p47 = scmp.eq.s32.totalorder %s30, 3
      %p48 = por %p46, %p47
      %p49 = scmp.ne.s32.totalorder %s38, %s39
      %p50 = scmp.eq.s32.totalorder %s30, 0
      %p51 = por %p49, %p50
      %p52 = scmp.ne.s32.totalorder %s38, %s39
      %p53 = scmp.eq.s32.totalorder %s31, 3
      %p54 = por %p52, %p53
      %p56 = scmp.ne.s32.totalorder %s39, %s55
      %p57 = scmp.eq.s32.totalorder %s31, 0
      %p58 = por %p56, %p57
      %s59 = sld [smem:[#allocation3 + %s25]]
      %s60 = sld [smem:[#allocation3 + %s32]]
      %s61 = ssub.s32 %s59, %s60
      %p62 = scmp.eq.s32.totalorder %s61, 0
      %s64 = sadd.s32 %s63, 1
      %s65 = scalar_select %p62, %s63, %s64
      %p68 = pneg %p62
      %p69 = scmp.eq.s32.totalorder %s25, 3
      %p70 = por %p68, %p69
      %p71 = scmp.ne.s32.totalorder %s63, %s66
      %p72 = scmp.eq.s32.totalorder %s25, 0
      %p73 = por %p71, %p72
      %p74 = scmp.ne.s32.totalorder %s63, %s66
      %p75 = scmp.eq.s32.totalorder %s30, 3
      %p76 = por %p74, %p75
      %p77 = scmp.ne.s32.totalorder %s66, %s67
      %p78 = scmp.eq.s32.totalorder %s30, 0
      %p79 = por %p77, %p78
      %p80 = scmp.ne.s32.totalorder %s66, %s67
      %p81 = scmp.eq.s32.totalorder %s31, 3
      %p82 = por %p80, %p81
      %p84 = scmp.ne.s32.totalorder %s67, %s83
      %p85 = scmp.eq.s32.totalorder %s31, 0
      %p86 = por %p84, %p85
      %s87 = sld [smem:[#allocation3 + %s25]]
      %s88 = sld [smem:[#allocation3 + %s32]]
      %s89 = ssub.s32 %s87, %s88
      %p90 = scmp.eq.s32.totalorder %s89, 0
      %s92 = sadd.s32 %s91, 1
      %s93 = scalar_select %p90, %s91, %s92
      %p96 = pneg %p90
      %p97 = scmp.eq.s32.totalorder %s25, 3
      %p98 = por %p96, %p97
      %p99 = scmp.ne.s32.totalorder %s91, %s94
      %p100 = scmp.eq.s32.totalorder %s25, 0
      %p101 = por %p99, %p100
      %p102 = scmp.ne.s32.totalorder %s91, %s94
      %p103 = scmp.eq.s32.totalorder %s30, 3
      %p104 = por %p102, %p103
      %p105 = scmp.ne.s32.totalorder %s94, %s95
      %p106 = scmp.eq.s32.totalorder %s30, 0
      %p107 = por %p105, %p106
      %p108 = scmp.ne.s32.totalorder %s94, %s95
      %p109 = scmp.eq.s32.totalorder %s31, 3
      %p110 = por %p108, %p109
      %p112 = scmp.ne.s32.totalorder %s95, %s111
      %p113 = scmp.eq.s32.totalorder %s31, 0
      %p114 = por %p112, %p113
      %s115 = sld [smem:[#allocation3 + %s25]]
      %s116 = sld [smem:[#allocation3 + %s32]]
      %s117 = ssub.s32 %s115, %s116
      %p118 = scmp.eq.s32.totalorder %s117, 0
      %s120 = sadd.s32 %s119, 1
      %s121 = scalar_select %p118, %s119, %s120
      %p124 = pneg %p118
      %p125 = scmp.eq.s32.totalorder %s25, 3
      %p126 = por %p124, %p125
      %p127 = scmp.ne.s32.totalorder %s119, %s122
      %p128 = scmp.eq.s32.totalorder %s25, 0
      %p129 = por %p127, %p128
      %p130 = scmp.ne.s32.totalorder %s119, %s122
      %p131 = scmp.eq.s32.totalorder %s30, 3
      %p132 = por %p130, %p131
      %p133 = scmp.ne.s32.totalorder %s122, %s123
      %p134 = scmp.eq.s32.totalorder %s30, 0
      %p135 = por %p133, %p134
      %p136 = scmp.ne.s32.totalorder %s122, %s123
      %p137 = scmp.eq.s32.totalorder %s31, 3
      %p138 = por %p136, %p137
      %p140 = scmp.ne.s32.totalorder %s123, %s139
      %p141 = scmp.eq.s32.totalorder %s31, 0
      %p142 = por %p140, %p141
      %s143 = sld [smem:[#allocation3 + %s25]]
      %s144 = sld [smem:[#allocation3 + %s32]]
      %s145 = ssub.s32 %s143, %s144
      %p146 = scmp.eq.s32.totalorder %s145, 0
      %s148 = sadd.s32 %s147, 1
      %s149 = scalar_select %p146, %s147, %s148
      %p152 = pneg %p146
      %p153 = scmp.eq.s32.totalorder %s25, 3
      %p154 = por %p152, %p153
      %p155 = scmp.ne.s32.totalorder %s147, %s150
      %p156 = scmp.eq.s32.totalorder %s25, 0
      %p157 = por %p155, %p156
      %p158 = scmp.ne.s32.totalorder %s147, %s150
      %p159 = scmp.eq.s32.totalorder %s30, 3
      %p160 = por %p158, %p159
      %p161 = scmp.ne.s32.totalorder %s150, %s151
      %p162 = scmp.eq.s32.totalorder %s30, 0
      %p163 = por %p161, %p162
      %p164 = scmp.ne.s32.totalorder %s150, %s151
      %p165 = scmp.eq.s32.totalorder %s31, 3
      %p166 = por %p164, %p165
      %p168 = scmp.ne.s32.totalorder %s151, %s167
      %p169 = scmp.eq.s32.totalorder %s31, 0
      %p170 = por %p168, %p169
      %s171 = ssub.s32 %s25, %s32
      %p172 = scmp.eq.s32.totalorder %s171, 0
      %s174 = sadd.s32 %s173, 1
      %s175 = scalar_select %p172, %s173, %s174
      %p178 = pneg %p172
      %p179 = scmp.eq.s32.totalorder %s25, 3
      %p180 = por %p178, %p179
      %p181 = scmp.ne.s32.totalorder %s173, %s176
      %p182 = scmp.eq.s32.totalorder %s25, 0
      %p183 = por %p181, %p182
      %p184 = scmp.ne.s32.totalorder %s173, %s176
      %p185 = scmp.eq.s32.totalorder %s30, 3
      %p186 = por %p184, %p185
      %p187 = scmp.ne.s32.totalorder %s176, %s177
      %p188 = scmp.eq.s32.totalorder %s30, 0
      %p189 = por %p187, %p188
      %p190 = scmp.ne.s32.totalorder %s176, %s177
      %p191 = scmp.eq.s32.totalorder %s31, 3
      %p192 = por %p190, %p191
      %p194 = scmp.ne.s32.totalorder %s177, %s193
      %p195 = scmp.eq.s32.totalorder %s31, 0
      %p196 = por %p194, %p195
      %p197 = scmp.le.s32.totalorder 1, %s25
      %p198 = scmp.lt.s32.totalorder %s25, 5
      %p199 = pnand %p197, %p198
      %p200 = pneg %p199
      // Predicated region
      $region9: #{tpu_custom_call.1} parent=5 // pred_check
        _
      $region10: #{tpu_custom_call.1} parent=5 // pred_check_branch
        %202 = sbr.rel (%p199) target = $region12
      $region11: #{tpu_custom_call.1} parent=5 // pred_region
        %s203 = ssub.s32 %s25, 1
      $region12: #{tpu_custom_call.1} parent=5 // pred_fallthru
        _
      %p204 = scmp.lt.s32.totalorder %s25, 4
      // Predicated region
      $region13: #{tpu_custom_call.1} parent=5 // pred_check
        %p205 = pneg %p204
      $region14: #{tpu_custom_call.1} parent=5 // pred_check_branch
        %207 = sbr.rel (%p205) target = $region16
      $region15: #{tpu_custom_call.1} parent=5 // pred_region
        // Predicated region
        $region17: #{tpu_custom_call.1} parent=15 // pred_check
          %p208 = pneg %p45
        $region18: #{tpu_custom_call.1} parent=15 // pred_check_branch
          %210 = sbr.rel (%p208) target = $region20
        $region19: #{tpu_custom_call.1} parent=15 // pred_region
          %s211 = sand.u32 %s35, 1
          %s212 = scalar_lea.sflag [#allocation5], %s211
          %s213 = sand.u32 %s35, 1
          %s214 = smul.addr %s213, 32
          %s215 = scalar_lea.vmem [#allocation4], %s214
          %s216 = smul.u32 4, %s25
          %s218 = ssub.s32 512, 512
          %219 = vsyncadd %s212, %s218
          %s220 = smul.addr %s216, 128
          %s221 = scalar_lea.hbm %s1, %s220
          %s222 = sshll.u32 %s215, 4
          %s223 = int_to_ptr.vmem [resolvable:$true] %s222
          %228 = dma.hbm_to_vmem [thread:$0]  %s221, 512, %s223, %s212, 128, 128, 8
        $region20: #{tpu_custom_call.1} parent=15 // pred_fallthru
          _
        // Predicated region
        $region21: #{tpu_custom_call.1} parent=15 // pred_check
          %p229 = pneg %p73
        $region22: #{tpu_custom_call.1} parent=15 // pred_check_branch
          %231 = sbr.rel (%p229) target = $region24
        $region23: #{tpu_custom_call.1} parent=15 // pred_region
          %s232 = sand.u32 %s25, 1
          %s233 = scalar_lea.sflag [#allocation8], %s232
          %s234 = sand.u32 %s63, 1
          %s235 = smul.addr %s234, 128
          %s236 = scalar_lea.vmem [#allocation7], %s235
          %s237 = sld [smem:[#allocation3 + %s25]]
          %s239 = ssub.s32 2048, 2048
          %240 = vsyncadd %s233, %s239
          %s241 = smul.addr %s237, 16
          %s242 = smul.addr %s241, 128
          %s243 = scalar_lea.hbm %s2, %s242
          %s244 = sshll.u32 %s236, 4
          %s245 = int_to_ptr.vmem [resolvable:$true] %s244
          %250 = dma.hbm_to_vmem [thread:$0]  %s243, 2048, %s245, %s233, 128, 128, 8
        $region24: #{tpu_custom_call.1} parent=15 // pred_fallthru
          _
        // Predicated region
        $region25: #{tpu_custom_call.1} parent=15 // pred_check
          %p251 = pneg %p101
        $region26: #{tpu_custom_call.1} parent=15 // pred_check_branch
          %253 = sbr.rel (%p251) target = $region28
        $region27: #{tpu_custom_call.1} parent=15 // pred_region
          %s254 = sld [smem:[#allocation3 + %s25]]
          %p255 = scmp.lt.s32.totalorder %s254, 2
          %s256 = scalar_select %p255, %s254, 2
          %s257 = scalar_lea.vmem %s3, %s256
          %s258 = sld [smem:[#allocation3 + %s25]]
        $region28: #{tpu_custom_call.1} parent=15 // pred_fallthru
          _
        // Predicated region
        $region29: #{tpu_custom_call.1} parent=15 // pred_check
          %p259 = pneg %p129
        $region30: #{tpu_custom_call.1} parent=15 // pred_check_branch
          %261 = sbr.rel (%p259) target = $region32
        $region31: #{tpu_custom_call.1} parent=15 // pred_region
          %s262 = sand.u32 %s25, 1
          %s263 = scalar_lea.sflag [#allocation8], %s262
          %s264 = sand.u32 %s119, 1
          %s265 = smul.addr %s264, 128
          %s266 = scalar_lea.vmem [#allocation9], %s265
          %s267 = sld [smem:[#allocation3 + %s25]]
          %s269 = ssub.s32 2048, 2048
          %270 = vsyncadd %s263, %s269
          %s271 = smul.addr %s267, 16
          %s272 = smul.addr %s271, 128
          %s273 = scalar_lea.hbm %s4, %s272
          %s274 = sshll.u32 %s266, 4
          %s275 = int_to_ptr.vmem [resolvable:$true] %s274
          %280 = dma.hbm_to_vmem [thread:$0]  %s273, 2048, %s275, %s263, 128, 128, 8
        $region32: #{tpu_custom_call.1} parent=15 // pred_fallthru
          _
        // Predicated region
        $region33: #{tpu_custom_call.1} parent=15 // pred_check
          %p281 = pneg %p157
        $region34: #{tpu_custom_call.1} parent=15 // pred_check_branch
          %283 = sbr.rel (%p281) target = $region36
        $region35: #{tpu_custom_call.1} parent=15 // pred_region
          %s284 = sld [smem:[#allocation3 + %s25]]
          %p285 = scmp.lt.s32.totalorder %s284, 2
          %s286 = scalar_select %p285, %s284, 2
          %s287 = scalar_lea.vmem %s5, %s286
          %s288 = sld [smem:[#allocation3 + %s25]]
        $region36: #{tpu_custom_call.1} parent=15 // pred_fallthru
          _
      $region16: #{tpu_custom_call.1} parent=5 // pred_fallthru
        _
      %p289 = scmp.le.s32.totalorder 1, %s25
      %p290 = scmp.lt.s32.totalorder %s25, 5
      %p291 = pnand %p289, %p290
      %p292 = pneg %p291
      // Predicated region
      $region37: #{tpu_custom_call.1} parent=5 // pred_check
        _
      $region38: #{tpu_custom_call.1} parent=5 // pred_check_branch
        %294 = sbr.rel (%p291) target = $region40
      $region39: #{tpu_custom_call.1} parent=5 // pred_region
        %s295 = ssub.s32 %s25, 1
        %s296 = sand.u32 %s38, 1
        %s297 = scalar_lea.sflag [#allocation5], %s296
        %s298 = sand.u32 %s38, 1
        %s299 = smul.addr %s298, 32
        %s300 = scalar_lea.vmem [#allocation4], %s299
        // Predicated region
        $region41: #{tpu_custom_call.1} parent=39 // pred_check
          %p301 = pneg %p51
        $region42: #{tpu_custom_call.1} parent=39 // pred_check_branch
          %303 = sbr.rel (%p301) target = $region44
        $region43: #{tpu_custom_call.1} parent=39 // pred_region
          %304 = dma.done %s297, 512
        $region44: #{tpu_custom_call.1} parent=39 // pred_fallthru
          _
        %s305 = sand.u32 %s30, 1
        %s306 = scalar_lea.sflag [#allocation8], %s305
        %s307 = sand.u32 %s66, 1
        %s308 = smul.addr %s307, 128
        %s309 = scalar_lea.vmem [#allocation7], %s308
        // Predicated region
        $region45: #{tpu_custom_call.1} parent=39 // pred_check
          %p310 = pneg %p79
        $region46: #{tpu_custom_call.1} parent=39 // pred_check_branch
          %312 = sbr.rel (%p310) target = $region48
        $region47: #{tpu_custom_call.1} parent=39 // pred_region
          %313 = dma.done %s306, 2048
        $region48: #{tpu_custom_call.1} parent=39 // pred_fallthru
          _
        %s314 = sand.u32 %s30, 1
        %s315 = scalar_lea.sflag [#allocation8], %s314
        %s316 = sand.u32 %s122, 1
        %s317 = smul.addr %s316, 128
        %s318 = scalar_lea.vmem [#allocation9], %s317
        // Predicated region
        $region49: #{tpu_custom_call.1} parent=39 // pred_check
          %p319 = pneg %p135
        $region50: #{tpu_custom_call.1} parent=39 // pred_check_branch
          %321 = sbr.rel (%p319) target = $region52
        $region51: #{tpu_custom_call.1} parent=39 // pred_region
          %322 = dma.done %s315, 2048
        $region52: #{tpu_custom_call.1} parent=39 // pred_fallthru
          _
        %s323 = sand.u32 %s38, 1
        %s324 = scalar_lea.sflag [#allocation5], %s323
        %s325 = sand.u32 %s38, 1
        %s326 = smul.addr %s325, 32
        %s327 = scalar_lea.vmem [#allocation4], %s326
        %p328 = pneg %p51
        %p329 = pneg %p48
        %s330 = sand.u32 %s30, 1
        %s331 = scalar_lea.sflag [#allocation8], %s330
        %s332 = sand.u32 %s66, 1
        %s333 = smul.addr %s332, 128
        %s334 = scalar_lea.vmem [#allocation7], %s333
        %p335 = pneg %p79
        %p336 = pneg %p76
        %s337 = sld [smem:[#allocation3 + %s30]]
        %p338 = scmp.lt.s32.totalorder %s337, 2
        %s339 = scalar_select %p338, %s337, 2
        %s340 = scalar_lea.vmem %s3, %s339
        %p341 = pneg %p107
        %p342 = pneg %p104
        %s343 = sand.u32 %s30, 1
        %s344 = scalar_lea.sflag [#allocation8], %s343
        %s345 = sand.u32 %s122, 1
        %s346 = smul.addr %s345, 128
        %s347 = scalar_lea.vmem [#allocation9], %s346
        %p348 = pneg %p135
        %p349 = pneg %p132
        %s350 = sld [smem:[#allocation3 + %s30]]
        %p351 = scmp.lt.s32.totalorder %s350, 2
        %s352 = scalar_select %p351, %s350, 2
        %s353 = scalar_lea.vmem %s5, %s352
        %p354 = pneg %p163
        %p355 = pneg %p160
        %p356 = pneg %p189
        %p357 = pneg %p186
        %s358 = sand.u32 %s176, 1
        %s359 = scalar_lea.sflag [#allocation6], %s358
        %s360 = sand.u32 %s176, 1
        %s361 = smul.addr %s360, 32
        %s362 = scalar_lea.vmem [#allocation10], %s361
        %s363 = smul.u32 4, %s30
        %s364 = sld [smem:[#allocation3 + %s30]]
        %s365 = sld [smem:[#allocation3 + %s30]]
        %p366 = scmp.lt.s32.totalorder %s365, 2
        %s367 = scalar_select %p366, %s365, 2
        %s368 = scalar_lea.vmem %s3, %s367
        %s369 = sld [smem:[#allocation3 + %s30]]
        %s370 = sld [smem:[#allocation3 + %s30]]
        %s371 = sld [smem:[#allocation3 + %s30]]
        %p372 = scmp.lt.s32.totalorder %s371, 2
        %s373 = scalar_select %p372, %s371, 2
        %s374 = scalar_lea.vmem %s5, %s373
        %s375 = sld [smem:[#allocation3 + %s30]]
        %s376 = smul.u32 4, %s30
        %v377 = vld [vmem:[%s300] sm:$0xff]
        %v378 = vld [vmem:[%s300 + $0x8] sm:$0xff]
        %v379 = vld [vmem:[%s300 + $0x10] sm:$0xff]
        %v380 = vld [vmem:[%s300 + $0x18] sm:$0xff]
        %v381 = vld [vmem:[%s309] sm:$0xff]
        %v382 = vld [vmem:[%s309 + $0x8] sm:$0xff]
        %v383 = vld [vmem:[%s309 + $0x10] sm:$0xff]
        %v384 = vld [vmem:[%s309 + $0x18] sm:$0xff]
        %v385 = vld [vmem:[%s309 + $0x20] sm:$0xff]
        %v386 = vld [vmem:[%s309 + $0x28] sm:$0xff]
        %v387 = vld [vmem:[%s309 + $0x30] sm:$0xff]
        %v388 = vld [vmem:[%s309 + $0x38] sm:$0xff]
        %v389 = vld [vmem:[%s309 + $0x40] sm:$0xff]
        %v390 = vld [vmem:[%s309 + $0x48] sm:$0xff]
        %v391 = vld [vmem:[%s309 + $0x50] sm:$0xff]
        %v392 = vld [vmem:[%s309 + $0x58] sm:$0xff]
        %v393 = vld [vmem:[%s309 + $0x60] sm:$0xff]
        %v394 = vld [vmem:[%s309 + $0x68] sm:$0xff]
        %v395 = vld [vmem:[%s309 + $0x70] sm:$0xff]
        %v396 = vld [vmem:[%s309 + $0x78] sm:$0xff]
        %v397 = vld [vmem:[%s368] sm:$0x1]
        %v399 = vlaneseq
        %v400 = vshrl.u32 %v399, 7
        %v401 = vsub.s32 0, %v400
        %v402 = vrot.slane %v397, %v401
        %404 = vmatprep.subr.mxu0 0.0
        %405 = vmatpush1.msra.mxu0 %v381
        %406 = vmatprep.subr.mxu0 0.0
        %407 = vmatpush1.msra.mxu0 %v382
        %408 = vmatprep.subr.mxu0 0.0
        %409 = vmatpush1.msra.mxu0 %v383
        %410 = vmatprep.subr.mxu0 0.0
        %411 = vmatpush1.msra.mxu0 %v384
        %412 = vmatprep.subr.mxu0 0.0
        %413 = vmatpush1.msra.mxu0 %v385
        %414 = vmatprep.subr.mxu0 0.0
        %415 = vmatpush1.msra.mxu0 %v386
        %416 = vmatprep.subr.mxu0 0.0
        %417 = vmatpush1.msra.mxu0 %v387
        %418 = vmatprep.subr.mxu0 0.0
        %419 = vmatpush1.msra.mxu0 %v388
        %420 = vmatprep.subr.mxu0 0.0
        %421 = vmatpush1.msra.mxu0 %v389
        %422 = vmatprep.subr.mxu0 0.0
        %423 = vmatpush1.msra.mxu0 %v390
        %424 = vmatprep.subr.mxu0 0.0
        %425 = vmatpush1.msra.mxu0 %v391
        %426 = vmatprep.subr.mxu0 0.0
        %427 = vmatpush1.msra.mxu0 %v392
        %428 = vmatprep.subr.mxu0 0.0
        %429 = vmatpush1.msra.mxu0 %v393
        %430 = vmatprep.subr.mxu0 0.0
        %431 = vmatpush1.msra.mxu0 %v394
        %432 = vmatprep.subr.mxu0 0.0
        %433 = vmatpush1.msra.mxu0 %v395
        %434 = vmatprep.subr.mxu0 0.0
        %435 = vmatpush1.msra.mxu0 %v396
        %436 = vmatprep.subr.mxu0 0.0
        %437 = vmatpush1.msra.mxu0 0.0
        %438 = vmatprep.subr.mxu0 0.0
        %439 = vmatpush1.msra.mxu0 0.0
        %440 = vmatprep.subr.mxu0 0.0
        %441 = vmatpush1.msra.mxu0 0.0
        %442 = vmatprep.subr.mxu0 0.0
        %443 = vmatpush1.msra.mxu0 0.0
        %444 = vmatprep.subr.mxu0 0.0
        %445 = vmatpush1.msra.mxu0 0.0
        %446 = vmatprep.subr.mxu0 0.0
        %447 = vmatpush1.msra.mxu0 0.0
        %448 = vmatprep.subr.mxu0 0.0
        %449 = vmatpush1.msra.mxu0 0.0
        %450 = vmatprep.subr.mxu0 0.0
        %451 = vmatpush1.msra.mxu0 0.0
        %452 = vmatprep.subr.mxu0 0.0
        %453 = vmatpush1.msra.mxu0 0.0
        %454 = vmatprep.subr.mxu0 0.0
        %455 = vmatpush1.msra.mxu0 0.0
        %456 = vmatprep.subr.mxu0 0.0
        %457 = vmatpush1.msra.mxu0 0.0
        %458 = vmatprep.subr.mxu0 0.0
        %459 = vmatpush1.msra.mxu0 0.0
        %460 = vmatprep.subr.mxu0 0.0
        %461 = vmatpush1.msra.mxu0 0.0
        %462 = vmatprep.subr.mxu0 0.0
        %463 = vmatpush1.msra.mxu0 0.0
        %464 = vmatprep.subr.mxu0 0.0
        %465 = vmatpush1.msra.mxu0 0.0
        %466 = vmatprep.subr.mxu0 0.0
        %467 = vmatpush1.msra.mxu0 0.0
        %468 = vmatprep.mubr.f32.mxu0 0.0
        %469 = vmatmul.mubr.f32.gmra.mrb[0].mxu0 %v377
        %v470 = vpop.f32.mrb[0].mxu0
        %v471 = vadd.f32 %v402, %v470
        %v472 = vpop.f32.mrb[0].mxu0
        %473 = vmatprep.mubr.f32.mxu0 0.0
        %474 = vmatmul.mubr.f32.gmra.mrb[0].mxu0 %v378
        %v475 = vpop.f32.mrb[0].mxu0
        %v476 = vadd.f32 %v402, %v475
        %v477 = vpop.f32.mrb[0].mxu0
        %478 = vmatprep.mubr.f32.mxu0 0.0
        %479 = vmatmul.mubr.f32.gmra.mrb[0].mxu0 %v379
        %v480 = vpop.f32.mrb[0].mxu0
        %v481 = vadd.f32 %v402, %v480
        %v482 = vpop.f32.mrb[0].mxu0
        %483 = vmatprep.mubr.f32.mxu0 0.0
        %484 = vmatmul.mubr.f32.gmra.mrb[0].mxu0 %v380
        %v485 = vpop.f32.mrb[0].mxu0
        %v486 = vadd.f32 %v402, %v485
        %v487 = vpop.f32.mrb[0].mxu0
        %488 = vdwg.mxu0
        %v489 = vmax.f32 %v471, 0.0
        %v490 = vmax.f32 %v476, 0.0
        %v491 = vmax.f32 %v481, 0.0
        %v492 = vmax.f32 %v486, 0.0
        %v493 = vld [vmem:[%s318] sm:$0xff]
        %v494 = vld [vmem:[%s318 + $0x8] sm:$0xff]
        %v495 = vld [vmem:[%s318 + $0x10] sm:$0xff]
        %v496 = vld [vmem:[%s318 + $0x18] sm:$0xff]
        %v497 = vld [vmem:[%s318 + $0x20] sm:$0xff]
        %v498 = vld [vmem:[%s318 + $0x28] sm:$0xff]
        %v499 = vld [vmem:[%s318 + $0x30] sm:$0xff]
        %v500 = vld [vmem:[%s318 + $0x38] sm:$0xff]
        %v501 = vld [vmem:[%s318 + $0x40] sm:$0xff]
        %v502 = vld [vmem:[%s318 + $0x48] sm:$0xff]
        %v503 = vld [vmem:[%s318 + $0x50] sm:$0xff]
        %v504 = vld [vmem:[%s318 + $0x58] sm:$0xff]
        %v505 = vld [vmem:[%s318 + $0x60] sm:$0xff]
        %v506 = vld [vmem:[%s318 + $0x68] sm:$0xff]
        %v507 = vld [vmem:[%s318 + $0x70] sm:$0xff]
        %v508 = vld [vmem:[%s318 + $0x78] sm:$0xff]
        %v509 = vld [vmem:[%s374] sm:$0x1]
        %v511 = vlaneseq
        %v512 = vshrl.u32 %v511, 7
        %v513 = vsub.s32 0, %v512
        %v514 = vrot.slane %v509, %v513
        %516 = vmatprep.subr.mxu0 0.0
        %517 = vmatpush1.msra.mxu0 %v493
        %518 = vmatprep.subr.mxu0 0.0
        %519 = vmatpush1.msra.mxu0 %v494
        %520 = vmatprep.subr.mxu0 0.0
        %521 = vmatpush1.msra.mxu0 %v495
        %522 = vmatprep.subr.mxu0 0.0
        %523 = vmatpush1.msra.mxu0 %v496
        %524 = vmatprep.subr.mxu0 0.0
        %525 = vmatpush1.msra.mxu0 %v497
        %526 = vmatprep.subr.mxu0 0.0
        %527 = vmatpush1.msra.mxu0 %v498
        %528 = vmatprep.subr.mxu0 0.0
        %529 = vmatpush1.msra.mxu0 %v499
        %530 = vmatprep.subr.mxu0 0.0
        %531 = vmatpush1.msra.mxu0 %v500
        %532 = vmatprep.subr.mxu0 0.0
        %533 = vmatpush1.msra.mxu0 %v501
        %534 = vmatprep.subr.mxu0 0.0
        %535 = vmatpush1.msra.mxu0 %v502
        %536 = vmatprep.subr.mxu0 0.0
        %537 = vmatpush1.msra.mxu0 %v503
        %538 = vmatprep.subr.mxu0 0.0
        %539 = vmatpush1.msra.mxu0 %v504
        %540 = vmatprep.subr.mxu0 0.0
        %541 = vmatpush1.msra.mxu0 %v505
        %542 = vmatprep.subr.mxu0 0.0
        %543 = vmatpush1.msra.mxu0 %v506
        %544 = vmatprep.subr.mxu0 0.0
        %545 = vmatpush1.msra.mxu0 %v507
        %546 = vmatprep.subr.mxu0 0.0
        %547 = vmatpush1.msra.mxu0 %v508
        %548 = vmatprep.subr.mxu0 0.0
        %549 = vmatpush1.msra.mxu0 0.0
        %550 = vmatprep.subr.mxu0 0.0
        %551 = vmatpush1.msra.mxu0 0.0
        %552 = vmatprep.subr.mxu0 0.0
        %553 = vmatpush1.msra.mxu0 0.0
        %554 = vmatprep.subr.mxu0 0.0
        %555 = vmatpush1.msra.mxu0 0.0
        %556 = vmatprep.subr.mxu0 0.0
        %557 = vmatpush1.msra.mxu0 0.0
        %558 = vmatprep.subr.mxu0 0.0
        %559 = vmatpush1.msra.mxu0 0.0
        %560 = vmatprep.subr.mxu0 0.0
        %561 = vmatpush1.msra.mxu0 0.0
        %562 = vmatprep.subr.mxu0 0.0
        %563 = vmatpush1.msra.mxu0 0.0
        %564 = vmatprep.subr.mxu0 0.0
        %565 = vmatpush1.msra.mxu0 0.0
        %566 = vmatprep.subr.mxu0 0.0
        %567 = vmatpush1.msra.mxu0 0.0
        %568 = vmatprep.subr.mxu0 0.0
        %569 = vmatpush1.msra.mxu0 0.0
        %570 = vmatprep.subr.mxu0 0.0
        %571 = vmatpush1.msra.mxu0 0.0
        %572 = vmatprep.subr.mxu0 0.0
        %573 = vmatpush1.msra.mxu0 0.0
        %574 = vmatprep.subr.mxu0 0.0
        %575 = vmatpush1.msra.mxu0 0.0
        %576 = vmatprep.subr.mxu0 0.0
        %577 = vmatpush1.msra.mxu0 0.0
        %578 = vmatprep.subr.mxu0 0.0
        %579 = vmatpush1.msra.mxu0 0.0
        %580 = vmatprep.mubr.f32.mxu0 0.0
        %581 = vmatmul.mubr.f32.gmra.mrb[0].mxu0 %v489
        %v582 = vpop.f32.mrb[0].mxu0
        %v583 = vadd.f32 %v514, %v582
        %v584 = vpop.f32.mrb[0].mxu0
        %585 = vmatprep.mubr.f32.mxu0 0.0
        %586 = vmatmul.mubr.f32.gmra.mrb[0].mxu0 %v490
        %v587 = vpop.f32.mrb[0].mxu0
        %v588 = vadd.f32 %v514, %v587
        %v589 = vpop.f32.mrb[0].mxu0
        %590 = vmatprep.mubr.f32.mxu0 0.0
        %591 = vmatmul.mubr.f32.gmra.mrb[0].mxu0 %v491
        %v592 = vpop.f32.mrb[0].mxu0
        %v593 = vadd.f32 %v514, %v592
        %v594 = vpop.f32.mrb[0].mxu0
        %595 = vmatprep.mubr.f32.mxu0 0.0
        %596 = vmatmul.mubr.f32.gmra.mrb[0].mxu0 %v492
        %v597 = vpop.f32.mrb[0].mxu0
        %v598 = vadd.f32 %v514, %v597
        %v599 = vpop.f32.mrb[0].mxu0
        %600 = vdwg.mxu0
        %601 = vst [vmem:[%s362] sm:$0xff] %v583
        %602 = vst [vmem:[%s362 + $0x8] sm:$0xff] %v588
        %603 = vst [vmem:[%s362 + $0x10] sm:$0xff] %v593
        %604 = vst [vmem:[%s362 + $0x18] sm:$0xff] %v598
        %s605 = sand.u32 %s176, 1
        %s606 = scalar_lea.sflag [#allocation6], %s605
        %s607 = sand.u32 %s176, 1
        %s608 = smul.addr %s607, 32
        %s609 = scalar_lea.vmem [#allocation10], %s608
        // Predicated region
        $region53: #{tpu_custom_call.1} parent=39 // pred_check
          %p610 = pneg %p186
        $region54: #{tpu_custom_call.1} parent=39 // pred_check_branch
          %612 = sbr.rel (%p610) target = $region56
        $region55: #{tpu_custom_call.1} parent=39 // pred_region
          %s613 = smul.u32 4, %s30
          %s615 = ssub.s32 512, 512
          %616 = vsyncadd %s606, %s615
          %s617 = smul.addr %s613, 128
          %s618 = scalar_lea.hbm %s6, %s617
          %s619 = sshll.u32 %s609, 4
          %s620 = int_to_ptr.vmem [resolvable:$true] %s619
          %625 = dma.vmem_to_hbm [thread:$0]  %s620, 512, %s618, %s606, 128, 128, 8
        $region56: #{tpu_custom_call.1} parent=39 // pred_fallthru
          _
      $region40: #{tpu_custom_call.1} parent=5 // pred_fallthru
        _
      %p626 = scmp.le.s32.totalorder 2, %s25
      // Predicated region
      $region57: #{tpu_custom_call.1} parent=5 // pred_check
        %p627 = pneg %p626
      $region58: #{tpu_custom_call.1} parent=5 // pred_check_branch
        %629 = sbr.rel (%p627) target = $region60
      $region59: #{tpu_custom_call.1} parent=5 // pred_region
        %s630 = ssub.s32 %s25, 2
        // Predicated region
        $region61: #{tpu_custom_call.1} parent=59 // pred_check
          %p631 = pneg %p192
        $region62: #{tpu_custom_call.1} parent=59 // pred_check_branch
          %633 = sbr.rel (%p631) target = $region64
        $region63: #{tpu_custom_call.1} parent=59 // pred_region
          %s634 = sand.u32 %s177, 1
          %s635 = scalar_lea.sflag [#allocation6], %s634
          %s636 = sand.u32 %s177, 1
          %s637 = smul.addr %s636, 32
          %s638 = scalar_lea.vmem [#allocation10], %s637
          %639 = dma.done %s635, 512
        $region64: #{tpu_custom_call.1} parent=59 // pred_fallthru
          _
      $region60: #{tpu_custom_call.1} parent=5 // pred_fallthru
        _
    $region6: #{tpu_custom_call.1} parent=1 // loop_footer
      %s29 = sadd.s32 1, %s25
    $region7: #{tpu_custom_call.1} parent=1 // loop_footer_branch
      %24 = sbr.rel target = $region3
    $region8: #{tpu_custom_call.1} parent=1 // loop_exit
      _
    %640 = vsyncpa [#allocation5], 1
    %s641 = scalar_lea.sflag [#allocation5], 1
    %642 = vsyncpa %s641, 1
    %643 = vsyncpa [#allocation8], 1
    %s644 = scalar_lea.sflag [#allocation8], 1
    %645 = vsyncpa %s644, 1
    %646 = vsyncpa [#allocation6], 1
    %s647 = scalar_lea.sflag [#allocation6], 1
    %648 = vsyncpa %s647, 1

</llo_original>
